<compile_context>
chip_gen: v6e
topology: v6e:2x2x1
jax: 0.10.0
libtpu: 0.0.40
codegen_flags: <defaults>
</compile_context>

<pallas_src>
import jax
import jax.numpy as jnp
from jax.experimental import pallas as pl
from jax.experimental.pallas import tpu as pltpu


def _round_up(x, m):
    return ((x + m - 1) // m) * m


def _pick_tile(dim_pad, cap):
    """Largest multiple of 128 that divides dim_pad and is <= max(cap, 128)."""
    cap = max(128, cap)
    if dim_pad <= cap:
        return dim_pad
    best = 128
    t = 256
    while t <= cap:
        if dim_pad % t == 0:
            best = t
        t += 128
    return best


def _tpu_config():
    """Return (vmem_budget_bytes, row_tile_cap, h_tile_cap, out_tile_cap) for this TPU."""
    kind = ""
    vmem = None
    try:
        kind = jax.devices()[0].device_kind.lower()
    except Exception:
        pass
    try:
        vmem = int(getattr(pltpu.get_tpu_info(), "vmem_capacity_bytes", 0)) or None
    except Exception:
        pass
    small_vmem = (vmem is not None and vmem <= (64 << 20)) or ("v7" in kind)
    if small_vmem:
        # v7x: 64 MiB VMEM per TC, HBM ridge ~320 flops/byte -> 512-row tiles, <= 52 MiB budget.
        return 52 << 20, 512, 512, 1024
    if "v5" in kind:
        # v5e: 128 MiB VMEM, ridge ~240 flops/byte -> 512-row tiles give headroom.
        return 100 << 20, 512, 512, 2048
    # v6e (default): 128 MiB VMEM, ridge ~650 flops/byte -> large row & hidden tiles.
    return 100 << 20, 1024, 1024, 2048


def _vmem_footprint(rt, in_dim, ht, ot, isx, isw, iso):
    """Approximate per-step VMEM bytes, including the fc1 intermediate and double buffering."""
    return (
        2 * rt * in_dim * isx        # x tile (double buffered)
        + 2 * in_dim * ht * isw      # w1 hidden slice
        + 2 * 8 * ht * 4             # b1 slice (f32, sublane-padded to 8 rows)
        + 2 * ht * ot * isw          # w2 slice
        + 2 * 8 * ot * 4             # b2 slice (f32, sublane-padded)
        + 2 * rt * ot * iso          # output tile (double buffered)
        + rt * ot * 4                # f32 accumulator scratch
        + rt * ht * 4                # fc1 intermediate in f32
        + rt * ht * isw              # fc1 intermediate cast copy for the second MXU pass
    )


def _mlp_kernel(x_ref, w1_ref, b1_ref, w2_ref, b2_ref, o_ref, acc_ref):
    """One (row, out, hidden) grid step of relu(x @ w1 + b1) @ w2 + b2 with f32 accumulation."""
    k = pl.program_id(2)

    @pl.when(k == 0)
    def _():
        acc_ref[...] = jnp.zeros_like(acc_ref)

    # fc1 + ReLU for this hidden slice.  x is already in the compute dtype (cast once in the
    # wrapper), biases are pre-cast to f32 -> no per-iteration VPU casts on the big operands.
    h = jnp.dot(x_ref[...], w1_ref[...], preferred_element_type=jnp.float32)
    h = jnp.maximum(h + b1_ref[...], 0.0)

    # fc2 partial product over this hidden slice, accumulated in f32 across the k axis.
    acc_ref[...] += jnp.dot(h.astype(w2_ref.dtype), w2_ref[...],
                            preferred_element_type=jnp.float32)

    @pl.when(k == pl.num_programs(2) - 1)
    def _():
        o_ref[...] = (acc_ref[...] + b2_ref[...]).astype(o_ref.dtype)
    # TODO(synk): dropout with p > 0.0 would need pltpu.prng_seed / prng_random_bits masking;
    #             the reference module defaults to dropout=0.0 (identity), so it is omitted.


def mlp_transformer(x, w1, b1, w2, b2):
    """x: (B, S, in_dim). w1: (in_dim, h_dim), b1: (h_dim,), w2: (h_dim, out_dim), b2: (out_dim,)."""
    B, S, in_dim = x.shape
    h_dim = w1.shape[1]
    out_dim = w2.shape[1]
    out_dtype = x.dtype

    # MXU compute dtype follows the weights (pass bf16 weights for the fast path).  x is cast
    # here, once, in the wrapper -- also halves x DMA bytes when x is f32 and weights are bf16.
    compute_dtype = w1.dtype
    budget, row_cap, h_cap, out_cap = _tpu_config()

    isx = jnp.dtype(compute_dtype).itemsize
    isw = jnp.dtype(w1.dtype).itemsize
    iso = jnp.dtype(out_dtype).itemsize

    T = B * S
    row_align = 16 if isx < 4 else 8          # bf16 packs 16 rows per vreg
    h_pad = _round_up(h_dim, 128)
    out_pad = _round_up(out_dim, 128)

    rt = min(row_cap, _round_up(T, row_align))
    ht = _pick_tile(h_pad, h_cap)
    ot = _pick_tile(out_pad, out_cap)
    # Fit into the generation VMEM budget: shrink h_tile first, then out_tile, then row_tile
    # (row_tile is what sets arithmetic intensity, so it goes last).
    for _ in range(16):
        need = _vmem_footprint(rt, in_dim, ht, ot, isx, isw, iso)
        if int(need * 1.25) + (4 << 20) <= budget:
            break
        if ht > 256:
            ht = _pick_tile(h_pad, ht // 2)
        elif ot > 512:
            ot = _pick_tile(out_pad, ot // 2)
        elif rt > row_align:
            rt = max(row_align, (rt // 2) // row_align * row_align)
        else:
            break

    T_pad = _round_up(T, rt)
    x2d = x.reshape(T, in_dim).astype(compute_dtype)
    if T_pad != T:
        x2d = jnp.pad(x2d, ((0, T_pad - T), (0, 0)))

    # Pad weights to 128-aligned hidden / output dims (zeros -> relu(0)=0 -> no contribution).
    # NOTE: for hot-path use, pre-pad the weights once outside the step fn so this is a no-op.
    w1p = w1
    b1p = b1.astype(jnp.float32).reshape(1, h_dim)
    w2p = w2
    b2p = b2.astype(jnp.float32).reshape(1, out_dim)
    if h_pad != h_dim:
        w1p = jnp.pad(w1p, ((0, 0), (0, h_pad - h_dim)))
        b1p = jnp.pad(b1p, ((0, 0), (0, h_pad - h_dim)))
        w2p = jnp.pad(w2p, ((0, h_pad - h_dim), (0, 0)))
    if out_pad != out_dim:
        w2p = jnp.pad(w2p, ((0, 0), (0, out_pad - out_dim)))
        b2p = jnp.pad(b2p, ((0, 0), (0, out_pad - out_dim)))

    n_rows, n_out, n_h = T_pad // rt, out_pad // ot, h_pad // ht

    need = _vmem_footprint(rt, in_dim, ht, ot, isx, isw, iso)
    vmem_limit = min(budget, max(int(need * 1.5) + (4 << 20), 32 << 20))

    # fc1 is recomputed once per out tile when n_out > 1 (keeps the accumulator/out tile bounded).
    flops = 2 * T_pad * in_dim * h_pad * n_out + 2 * T_pad * h_pad * out_pad
    w1_passes = n_rows * n_out if n_h > 1 else 1
    w2_passes = n_rows if (n_h > 1 or n_out > 1) else 1
    bytes_accessed = (
        T_pad * in_dim * isx + T_pad * out_pad * iso
        + w1_passes * in_dim * h_pad * isw + h_pad * 4
        + w2_passes * h_pad * out_pad * isw + out_pad * 4
    )

    out2d = pl.pallas_call(
        _mlp_kernel,
        out_shape=jax.ShapeDtypeStruct((T_pad, out_pad), out_dtype),
        grid_spec=pltpu.PrefetchScalarGridSpec(
            num_scalar_prefetch=0,
            grid=(n_rows, n_out, n_h),
            in_specs=[
                pl.BlockSpec((rt, in_dim), lambda i, j, k: (i, 0)),   # x row tile
                pl.BlockSpec((in_dim, ht), lambda i, j, k: (0, k)),   # w1 hidden slice
                pl.BlockSpec((1, ht), lambda i, j, k: (0, k)),        # b1 hidden slice (f32)
                pl.BlockSpec((ht, ot), lambda i, j, k: (k, j)),       # w2 (hidden, out) slice
                pl.BlockSpec((1, ot), lambda i, j, k: (0, j)),        # b2 out slice (f32)
            ],
            out_specs=pl.BlockSpec((rt, ot), lambda i, j, k: (i, j)),
            scratch_shapes=[pltpu.VMEM((rt, ot), jnp.float32)],
        ),
        compiler_params=pltpu.CompilerParams(
            dimension_semantics=("parallel", "parallel", "arbitrary"),
            vmem_limit_bytes=vmem_limit,
        ),
        cost_estimate=pl.CostEstimate(
            flops=flops, transcendentals=0, bytes_accessed=bytes_accessed),
    )(x2d, w1p, b1p, w2p, b2p)

    return out2d[:T, :out_dim].reshape(B, S, out_dim)


def init_params(key, in_dim, h_dim, out_dim, dtype=jnp.float32):
    """Deterministic init mimicking torch.nn.Linear default (uniform +-1/sqrt(fan_in))."""
    k1, k2, k3, k4 = jax.random.split(key, 4)
    bound1 = 1.0 / (in_dim ** 0.5)
    bound2 = 1.0 / (h_dim ** 0.5)
    w1 = jax.random.uniform(k1, (in_dim, h_dim), dtype, -bound1, bound1)
    b1 = jax.random.uniform(k2, (h_dim,), dtype, -bound1, bound1)
    w2 = jax.random.uniform(k3, (h_dim, out_dim), dtype, -bound2, bound2)
    b2 = jax.random.uniform(k4, (out_dim,), dtype, -bound2, bound2)
    return w1, b1, w2, b2


def mlp_reference(x, w1, b1, w2, b2):
    h = jnp.maximum(jnp.dot(x, w1) + b1, 0.0)
    return jnp.dot(h, w2) + b2


if __name__ == "__main__":
    # Small shapes consistent with the module: (batch, seq, in_dim), h_dim = 4*in_dim, out_d = in_dim.
    batch, seq, in_dim = 2, 8, 32
    h_dim, out_dim = 128, 32

    key = jax.random.PRNGKey(0)
    kx, kp = jax.random.split(key)
    x = jax.random.normal(kx, (batch, seq, in_dim), jnp.float32)
    w1, b1, w2, b2 = init_params(kp, in_dim, h_dim, out_dim)

    ref = mlp_reference(x, w1, b1, w2, b2)

    # f32 path (tight tolerance vs. reference).
    out = mlp_transformer(x, w1, b1, w2, b2)
    out = jax.block_until_ready(out)
    assert out.shape == (batch, seq, out_dim), out.shape
    assert jnp.allclose(out, ref, atol=1e-5, rtol=1e-5), "f32 mismatch vs reference"

    # bf16-weight MXU path (loose tolerance, mixed precision).
    out_bf16 = mlp_transformer(x, w1.astype(jnp.bfloat16), b1.astype(jnp.bfloat16),
                               w2.astype(jnp.bfloat16), b2.astype(jnp.bfloat16))
    out_bf16 = jax.block_until_ready(out_bf16)
    assert out_bf16.shape == (batch, seq, out_dim), out_bf16.shape
    assert jnp.allclose(out_bf16, ref, atol=1e-1, rtol=1e-1), "bf16 mismatch vs reference"

    print("KERNEL_OK")
</pallas_src>

<mosaic_0001>
module attributes {stable_mosaic.version = 11 : i64} {
  func.func @_mlp_kernel(%arg0: i32, %arg1: i32, %arg2: i32, %arg3: memref<16x32xf32, #tpu.memory_space<vmem>>, %arg4: memref<32x128xf32, #tpu.memory_space<vmem>>, %arg5: memref<1x128xf32, #tpu.memory_space<vmem>>, %arg6: memref<128x128xf32, #tpu.memory_space<vmem>>, %arg7: memref<1x128xf32, #tpu.memory_space<vmem>>, %arg8: memref<16x128xf32, #tpu.memory_space<vmem>>, %arg9: memref<16x128xf32, #tpu.memory_space<vmem>>) attributes {dimension_semantics = [#tpu.dimension_semantics<parallel>, #tpu.dimension_semantics<parallel>, #tpu.dimension_semantics<arbitrary>], iteration_bounds = array<i64: 1, 1, 1>, scalar_prefetch = 0 : i64, scratch_operands = 1 : i64, tpu.core_type = #tpu.core_type<tc>, window_params = [{transform_indices = @transform_0, window_bounds = array<i64: 16, 32>}, {transform_indices = @transform_1, window_bounds = array<i64: 32, 128>}, {transform_indices = @transform_2, window_bounds = array<i64: 1, 128>}, {transform_indices = @transform_3, window_bounds = array<i64: 128, 128>}, {transform_indices = @transform_4, window_bounds = array<i64: 1, 128>}, {transform_indices = @transform_5, window_bounds = array<i64: 16, 128>}]} {
    %c0_i32 = arith.constant 0 : i32
    %0 = arith.cmpi eq, %arg2, %c0_i32 : i32
    %1 = arith.extui %0 : i1 to i32
    %c0_i32_0 = arith.constant 0 : i32
    %2 = arith.cmpi ne, %1, %c0_i32_0 : i32
    scf.if %2 {
      %cst_16 = arith.constant 0.000000e+00 : f32
      %19 = vector.broadcast %cst_16 : f32 to vector<16x128xf32>
      %c0_17 = arith.constant 0 : index
      %c0_18 = arith.constant 0 : index
      %20 = vector.load %arg9[%c0_17, %c0_18] : memref<16x128xf32, #tpu.memory_space<vmem>>, vector<16x128xf32>
      tpu.vector_store %arg9[%c0_17, %c0_18], %19 {strides = array<i32>} : memref<16x128xf32, #tpu.memory_space<vmem>>, vector<16x128xf32>,
    } else {
    }
    %c0 = arith.constant 0 : index
    %c0_1 = arith.constant 0 : index
    %3 = vector.load %arg3[%c0, %c0_1] : memref<16x32xf32, #tpu.memory_space<vmem>>, vector<16x32xf32>
    %c0_2 = arith.constant 0 : index
    %c0_3 = arith.constant 0 : index
    %4 = vector.load %arg4[%c0_2, %c0_3] : memref<32x128xf32, #tpu.memory_space<vmem>>, vector<32x128xf32>
    %cst = arith.constant dense<0.000000e+00> : vector<16x128xf32>
    %5 = tpu.matmul %3, %4, %cst {dimension_numbers = #tpu.dot_dimension_numbers<[1], [0], [0], [1], [0, 0, 1, 1], [], []>} : vector<16x32xf32>, vector<32x128xf32>, vector<16x128xf32> -> vector<16x128xf32>
    %c0_4 = arith.constant 0 : index
    %c0_5 = arith.constant 0 : index
    %6 = vector.load %arg5[%c0_4, %c0_5] : memref<1x128xf32, #tpu.memory_space<vmem>>, vector<1x128xf32>
    %7 = vector.broadcast %6 : vector<1x128xf32> to vector<16x128xf32>
    %8 = arith.addf %5, %7 : vector<16x128xf32>
    %cst_6 = arith.constant 0.000000e+00 : f32
    %9 = vector.broadcast %cst_6 : f32 to vector<16x128xf32>
    %10 = arith.maximumf %8, %9 : vector<16x128xf32>
    %c0_7 = arith.constant 0 : index
    %c0_8 = arith.constant 0 : index
    %11 = vector.load %arg9[%c0_7, %c0_8] : memref<16x128xf32, #tpu.memory_space<vmem>>, vector<16x128xf32>
    %c0_9 = arith.constant 0 : index
    %c0_10 = arith.constant 0 : index
    %12 = vector.load %arg6[%c0_9, %c0_10] : memref<128x128xf32, #tpu.memory_space<vmem>>, vector<128x128xf32>
    %cst_11 = arith.constant dense<0.000000e+00> : vector<16x128xf32>
    %13 = tpu.matmul %10, %12, %cst_11 {dimension_numbers = #tpu.dot_dimension_numbers<[1], [0], [0], [1], [0, 0, 1, 1], [], []>} : vector<16x128xf32>, vector<128x128xf32>, vector<16x128xf32> -> vector<16x128xf32>
    %14 = arith.addf %11, %13 : vector<16x128xf32>
    %c0_12 = arith.constant 0 : index
    %c0_13 = arith.constant 0 : index
    %15 = vector.load %arg9[%c0_12, %c0_13] : memref<16x128xf32, #tpu.memory_space<vmem>>, vector<16x128xf32>
    tpu.vector_store %arg9[%c0_12, %c0_13], %14 {strides = array<i32>} : memref<16x128xf32, #tpu.memory_space<vmem>>, vector<16x128xf32>,
    %c0_i32_14 = arith.constant 0 : i32
    %16 = arith.cmpi eq, %arg2, %c0_i32_14 : i32
    %17 = arith.extui %16 : i1 to i32
    %c0_i32_15 = arith.constant 0 : i32
    %18 = arith.cmpi ne, %17, %c0_i32_15 : i32
    scf.if %18 {
      %c0_16 = arith.constant 0 : index
      %c0_17 = arith.constant 0 : index
      %19 = vector.load %arg9[%c0_16, %c0_17] : memref<16x128xf32, #tpu.memory_space<vmem>>, vector<16x128xf32>
      %c0_18 = arith.constant 0 : index
      %c0_19 = arith.constant 0 : index
      %20 = vector.load %arg7[%c0_18, %c0_19] : memref<1x128xf32, #tpu.memory_space<vmem>>, vector<1x128xf32>
      %21 = vector.broadcast %20 : vector<1x128xf32> to vector<16x128xf32>
      %22 = arith.addf %19, %21 : vector<16x128xf32>
      %c0_20 = arith.constant 0 : index
      %c0_21 = arith.constant 0 : index
      %23 = vector.load %arg8[%c0_20, %c0_21] : memref<16x128xf32, #tpu.memory_space<vmem>>, vector<16x128xf32>
      tpu.vector_store %arg8[%c0_20, %c0_21], %22 {strides = array<i32>} : memref<16x128xf32, #tpu.memory_space<vmem>>, vector<16x128xf32>,
    } else {
    }
    return
  }
  func.func @transform_0(%arg0: i32, %arg1: i32, %arg2: i32) -> (i32, i32) {
    %c0_i32 = arith.constant 0 : i32
    %c0_i32_0 = arith.constant 0 : i32
    return %arg0, %c0_i32 : i32, i32
  }
  func.func @transform_1(%arg0: i32, %arg1: i32, %arg2: i32) -> (i32, i32) {
    %c0_i32 = arith.constant 0 : i32
    %c0_i32_0 = arith.constant 0 : i32
    return %c0_i32, %arg2 : i32, i32
  }
  func.func @transform_2(%arg0: i32, %arg1: i32, %arg2: i32) -> (i32, i32) {
    %c0_i32 = arith.constant 0 : i32
    %c0_i32_0 = arith.constant 0 : i32
    return %c0_i32, %arg2 : i32, i32
  }
  func.func @transform_3(%arg0: i32, %arg1: i32, %arg2: i32) -> (i32, i32) {
    %c0_i32 = arith.constant 0 : i32
    return %arg2, %arg1 : i32, i32
  }
  func.func @transform_4(%arg0: i32, %arg1: i32, %arg2: i32) -> (i32, i32) {
    %c0_i32 = arith.constant 0 : i32
    %c0_i32_0 = arith.constant 0 : i32
    return %c0_i32, %arg1 : i32, i32
  }
  func.func @transform_5(%arg0: i32, %arg1: i32, %arg2: i32) -> (i32, i32) {
    %c0_i32 = arith.constant 0 : i32
    return %arg0, %arg1 : i32, i32
  }
}

</mosaic_0001>

<llo_original>
// kernel: tpu_custom_call.1
$region0: #{tpu_custom_call.1}
  #allocation0 [shape = 'u32[]', space=smem, size = 0x4, offset = 0x4, fixed_abs, tag = 'smem constant byte address 0x4 - core index']
  #allocation1 [shape = 'u32[144,128]{1,0:T(1,128)}', space=vmem, size = 0x12000, scoped, tag = 'internal scratch']
  #allocation2 [shape = 'f32[16,128]{1,0:T(8,128)}', space=vmem, size = 0x2000, scoped, tag = 'scratch operand']
  %s0 = inlined_call_operand.hbm [shape: f32[16,32], index: 0, kind: input, shape index: {}]
  %s1 = inlined_call_operand.hbm [shape: f32[32,128], index: 1, kind: input, shape index: {}]
  %s2 = inlined_call_operand.vmem [shape: f32[1,128], index: 2, kind: input, shape index: {}]
  %s3 = inlined_call_operand.hbm [shape: f32[128,128], index: 3, kind: input, shape index: {}]
  %s4 = inlined_call_operand.vmem [shape: f32[1,128], index: 4, kind: input, shape index: {}]
  %s5 = inlined_call_operand.hbm [shape: f32[16,128], index: 5, kind: output, shape index: {}]
  %s6 = sld [smem:[#allocation0]]
  $region50: #{tpu_custom_call.1} parent=0
    _
  %s8 = ssub.s32 1, %s6
  %s9 = scalar_select 0, %s8, %s6
  $region1: #{tpu_custom_call.1} parent=0
    #allocation3 [shape = 'u8[8192]{0}', space=vmem, size = 0x2000, scoped, tag = 'input window, operand 0, single buffered']
    #allocation4 [shape = 's32[1]{0}', space=sflag, size = 0x4, scoped, tag = 'scoped memory for tpu_custom_call.1']
    #allocation5 [shape = 's32[1]{0}', space=sflag, size = 0x4, scoped, tag = 'scoped memory for tpu_custom_call.1']
    #allocation6 [shape = 'u8[16384]{0}', space=vmem, size = 0x4000, scoped, tag = 'input window, operand 1, single buffered']
    #allocation7 [shape = 's32[1]{0}', space=sflag, size = 0x4, scoped, tag = 'scoped memory for tpu_custom_call.1']
    #allocation8 [shape = 'u8[65536]{0}', space=vmem, size = 0x10000, scoped, tag = 'input window, operand 3, single buffered']
    #allocation9 [shape = 'u8[8192]{0}', space=vmem, size = 0x2000, scoped, tag = 'output window, operand 0, single buffered']
    %10 = vsyncpa [#allocation4], 0
    %11 = vsyncpa [#allocation7], 0
    %12 = vsyncpa [#allocation5], 0
    // Predicated region
    $region2: #{tpu_custom_call.1} parent=1 // pred_check
      _
    $region3: #{tpu_custom_call.1} parent=1 // pred_check_branch
      %14 = sbr.rel (0) target = $region5
    $region4: #{tpu_custom_call.1} parent=1 // pred_region
      %s16 = ssub.s32 256, 256
      %17 = vsyncadd [#allocation4], %s16
      %s18 = sshll.u32 [#allocation3], 4
      %s19 = int_to_ptr.vmem [resolvable:$true] %s18
      %24 = dma.hbm_to_vmem [thread:$0]  %s0, 256, %s19, [#allocation4], 128, 128, 8
    $region5: #{tpu_custom_call.1} parent=1 // pred_fallthru
      _
    // Predicated region
    $region6: #{tpu_custom_call.1} parent=1 // pred_check
      _
    $region7: #{tpu_custom_call.1} parent=1 // pred_check_branch
      %26 = sbr.rel (0) target = $region9
    $region8: #{tpu_custom_call.1} parent=1 // pred_region
      %s28 = ssub.s32 512, 512
      %29 = vsyncadd [#allocation7], %s28
      %s30 = sshll.u32 [#allocation6], 4
      %s31 = int_to_ptr.vmem [resolvable:$true] %s30
      %36 = dma.hbm_to_vmem [thread:$0]  %s1, 512, %s31, [#allocation7], 128, 128, 8
    $region9: #{tpu_custom_call.1} parent=1 // pred_fallthru
      _
    // Predicated region
    $region10: #{tpu_custom_call.1} parent=1 // pred_check
      _
    $region11: #{tpu_custom_call.1} parent=1 // pred_check_branch
      %38 = sbr.rel (0) target = $region13
    $region12: #{tpu_custom_call.1} parent=1 // pred_region
      _
    $region13: #{tpu_custom_call.1} parent=1 // pred_fallthru
      _
    // Predicated region
    $region14: #{tpu_custom_call.1} parent=1 // pred_check
      _
    $region15: #{tpu_custom_call.1} parent=1 // pred_check_branch
      %40 = sbr.rel (0) target = $region17
    $region16: #{tpu_custom_call.1} parent=1 // pred_region
      %s42 = ssub.s32 2048, 2048
      %43 = vsyncadd [#allocation7], %s42
      %s44 = sshll.u32 [#allocation8], 4
      %s45 = int_to_ptr.vmem [resolvable:$true] %s44
      %50 = dma.hbm_to_vmem [thread:$0]  %s3, 2048, %s45, [#allocation7], 128, 128, 8
    $region17: #{tpu_custom_call.1} parent=1 // pred_fallthru
      _
    // Predicated region
    $region18: #{tpu_custom_call.1} parent=1 // pred_check
      _
    $region19: #{tpu_custom_call.1} parent=1 // pred_check_branch
      %52 = sbr.rel (0) target = $region21
    $region20: #{tpu_custom_call.1} parent=1 // pred_region
      _
    $region21: #{tpu_custom_call.1} parent=1 // pred_fallthru
      _
    // Predicated region
    $region22: #{tpu_custom_call.1} parent=1 // pred_check
      _
    $region23: #{tpu_custom_call.1} parent=1 // pred_check_branch
      %54 = sbr.rel (0) target = $region25
    $region24: #{tpu_custom_call.1} parent=1 // pred_region
      %55 = dma.done [#allocation4], 256
    $region25: #{tpu_custom_call.1} parent=1 // pred_fallthru
      _
    // Predicated region
    $region26: #{tpu_custom_call.1} parent=1 // pred_check
      _
    $region27: #{tpu_custom_call.1} parent=1 // pred_check_branch
      %57 = sbr.rel (0) target = $region29
    $region28: #{tpu_custom_call.1} parent=1 // pred_region
      %58 = dma.done [#allocation7], 512
    $region29: #{tpu_custom_call.1} parent=1 // pred_fallthru
      _
    // Predicated region
    $region30: #{tpu_custom_call.1} parent=1 // pred_check
      _
    $region31: #{tpu_custom_call.1} parent=1 // pred_check_branch
      %60 = sbr.rel (0) target = $region33
    $region32: #{tpu_custom_call.1} parent=1 // pred_region
      %61 = dma.done [#allocation7], 2048
    $region33: #{tpu_custom_call.1} parent=1 // pred_fallthru
      _
    %p62 = scmp.eq.s32.totalorder 0, 0
    // Predicated region
    $region34: #{tpu_custom_call.1} parent=1 // pred_check
      %p63 = pneg %p62
    $region35: #{tpu_custom_call.1} parent=1 // pred_check_branch
      %65 = sbr.rel (%p63) target = $region37
    $region36: #{tpu_custom_call.1} parent=1 // pred_region
      %66 = vst [vmem:[#allocation2] sm:$0xff] 0.0
      %67 = vst [vmem:[#allocation2 + $0x8] sm:$0xff] 0.0
    $region37: #{tpu_custom_call.1} parent=1 // pred_fallthru
      _
    %v68 = vld [vmem:[#allocation3] sm:$0xff]
    %v69 = vld [vmem:[#allocation3 + $0x8] sm:$0xff]
    %v70 = vld [vmem:[#allocation6] sm:$0xff]
    %v71 = vld [vmem:[#allocation6 + $0x8] sm:$0xff]
    %v72 = vld [vmem:[#allocation6 + $0x10] sm:$0xff]
    %v73 = vld [vmem:[#allocation6 + $0x18] sm:$0xff]
    %v74 = vld [vmem:[%s2] sm:$0x1]
    %v76 = vlaneseq
    %v77 = vshrl.u32 %v76, 7
    %v78 = vsub.s32 0, %v77
    %v79 = vrot.slane %v74, %v78
    %vm81 = vcmask 261120
    %v83 = vsel %vm81, %v68, 0
    %v86 = vsel %vm81, %v69, 0
    %88 = vmatprep.subr.mxu0 0.0
    %89 = vmatpush1.msra.mxu0 0.0
    %90 = vmatprep.subr.mxu0 0.0
    %91 = vmatpush1.msra.mxu0 0.0
    %92 = vmatprep.subr.mxu0 0.0
    %93 = vmatpush1.msra.mxu0 0.0
    %94 = vmatprep.subr.mxu0 0.0
    %95 = vmatpush1.msra.mxu0 0.0
    %96 = vmatprep.subr.mxu0 0.0
    %97 = vmatpush1.msra.mxu0 0.0
    %98 = vmatprep.subr.mxu0 0.0
    %99 = vmatpush1.msra.mxu0 0.0
    %100 = vmatprep.subr.mxu0 0.0
    %101 = vmatpush1.msra.mxu0 0.0
    %102 = vmatprep.subr.mxu0 0.0
    %103 = vmatpush1.msra.mxu0 0.0
    %104 = vmatprep.subr.mxu0 0.0
    %105 = vmatpush1.msra.mxu0 0.0
    %106 = vmatprep.subr.mxu0 0.0
    %107 = vmatpush1.msra.mxu0 0.0
    %108 = vmatprep.subr.mxu0 0.0
    %109 = vmatpush1.msra.mxu0 0.0
    %110 = vmatprep.subr.mxu0 0.0
    %111 = vmatpush1.msra.mxu0 0.0
    %112 = vmatprep.subr.mxu0 0.0
    %113 = vmatpush1.msra.mxu0 %v73
    %114 = vmatprep.subr.mxu0 0.0
    %115 = vmatpush1.msra.mxu0 %v72
    %116 = vmatprep.subr.mxu0 0.0
    %117 = vmatpush1.msra.mxu0 %v71
    %118 = vmatprep.subr.mxu0 0.0
    %119 = vmatpush1.msra.mxu0 %v70
    %120 = vmatprep.subr.mxu0 0.0
    %121 = vmatpush2.msra.mxu0 0.0
    %122 = vmatprep.subr.mxu0 0.0
    %123 = vmatpush2.msra.mxu0 0.0
    %124 = vmatprep.subr.mxu0 0.0
    %125 = vmatpush2.msra.mxu0 0.0
    %126 = vmatprep.subr.mxu0 0.0
    %127 = vmatpush2.msra.mxu0 0.0
    %128 = vmatprep.subr.mxu0 0.0
    %129 = vmatpush2.msra.mxu0 0.0
    %130 = vmatprep.subr.mxu0 0.0
    %131 = vmatpush2.msra.mxu0 0.0
    %132 = vmatprep.subr.mxu0 0.0
    %133 = vmatpush2.msra.mxu0 0.0
    %134 = vmatprep.subr.mxu0 0.0
    %135 = vmatpush2.msra.mxu0 0.0
    %136 = vmatprep.subr.mxu0 0.0
    %137 = vmatpush2.msra.mxu0 0.0
    %138 = vmatprep.subr.mxu0 0.0
    %139 = vmatpush2.msra.mxu0 0.0
    %140 = vmatprep.subr.mxu0 0.0
    %141 = vmatpush2.msra.mxu0 0.0
    %142 = vmatprep.subr.mxu0 0.0
    %143 = vmatpush2.msra.mxu0 0.0
    %144 = vmatprep.subr.mxu0 0.0
    %145 = vmatpush2.msra.mxu0 0.0
    %146 = vmatprep.subr.mxu0 0.0
    %147 = vmatpush2.msra.mxu0 0.0
    %148 = vmatprep.subr.mxu0 0.0
    %149 = vmatpush2.msra.mxu0 0.0
    %150 = vmatprep.subr.mxu0 0.0
    %151 = vmatpush2.msra.mxu0 0.0
    %152 = vmatprep.mubr.f32.mxu0 0.0
    %153 = vmatmul.mubr.f32.gmra.mxu0 %v83
    %v154 = vpop.f32.mrf.mxu0
    %v155 = vadd.f32 %v79, %v154
    %v156 = vpop.f32.mrf.mxu0
    %157 = vmatprep.mubr.f32.mxu0 0.0
    %158 = vmatmul.mubr.f32.gmra.mxu0 %v86
    %v159 = vpop.f32.mrf.mxu0
    %v160 = vadd.f32 %v79, %v159
    %v161 = vpop.f32.mrf.mxu0
    %162 = vdwg.mxu0
    %v163 = vmax.f32 %v155, 0.0
    %v164 = vmax.f32 %v160, 0.0
    %v165 = vld [vmem:[#allocation2] sm:$0xff]
    %v166 = vld [vmem:[#allocation2 + $0x8] sm:$0xff]
    %v167 = vld [vmem:[#allocation8] sm:$0xff]
    %v168 = vld [vmem:[#allocation8 + $0x8] sm:$0xff]
    %v169 = vld [vmem:[#allocation8 + $0x10] sm:$0xff]
    %v170 = vld [vmem:[#allocation8 + $0x18] sm:$0xff]
    %v171 = vld [vmem:[#allocation8 + $0x20] sm:$0xff]
    %v172 = vld [vmem:[#allocation8 + $0x28] sm:$0xff]
    %v173 = vld [vmem:[#allocation8 + $0x30] sm:$0xff]
    %v174 = vld [vmem:[#allocation8 + $0x38] sm:$0xff]
    %v175 = vld [vmem:[#allocation8 + $0x40] sm:$0xff]
    %v176 = vld [vmem:[#allocation8 + $0x48] sm:$0xff]
    %v177 = vld [vmem:[#allocation8 + $0x50] sm:$0xff]
    %v178 = vld [vmem:[#allocation8 + $0x58] sm:$0xff]
    %v179 = vld [vmem:[#allocation8 + $0x60] sm:$0xff]
    %v180 = vld [vmem:[#allocation8 + $0x68] sm:$0xff]
    %v181 = vld [vmem:[#allocation8 + $0x70] sm:$0xff]
    %v182 = vld [vmem:[#allocation8 + $0x78] sm:$0xff]
    %183 = vmatprep.subr.mxu0 0.0
    %184 = vmatpush1.msra.mxu0 %v182
    %185 = vmatprep.subr.mxu0 0.0
    %186 = vmatpush1.msra.mxu0 %v181
    %187 = vmatprep.subr.mxu0 0.0
    %188 = vmatpush1.msra.mxu0 %v180
    %189 = vmatprep.subr.mxu0 0.0
    %190 = vmatpush1.msra.mxu0 %v179
    %191 = vmatprep.subr.mxu0 0.0
    %192 = vmatpush1.msra.mxu0 %v178
    %193 = vmatprep.subr.mxu0 0.0
    %194 = vmatpush1.msra.mxu0 %v177
    %195 = vmatprep.subr.mxu0 0.0
    %196 = vmatpush1.msra.mxu0 %v176
    %197 = vmatprep.subr.mxu0 0.0
    %198 = vmatpush1.msra.mxu0 %v175
    %199 = vmatprep.subr.mxu0 0.0
    %200 = vmatpush1.msra.mxu0 %v174
    %201 = vmatprep.subr.mxu0 0.0
    %202 = vmatpush1.msra.mxu0 %v173
    %203 = vmatprep.subr.mxu0 0.0
    %204 = vmatpush1.msra.mxu0 %v172
    %205 = vmatprep.subr.mxu0 0.0
    %206 = vmatpush1.msra.mxu0 %v171
    %207 = vmatprep.subr.mxu0 0.0
    %208 = vmatpush1.msra.mxu0 %v170
    %209 = vmatprep.subr.mxu0 0.0
    %210 = vmatpush1.msra.mxu0 %v169
    %211 = vmatprep.subr.mxu0 0.0
    %212 = vmatpush1.msra.mxu0 %v168
    %213 = vmatprep.subr.mxu0 0.0
    %214 = vmatpush1.msra.mxu0 %v167
    %215 = vmatprep.subr.mxu0 0.0
    %216 = vmatpush2.msra.mxu0 0.0
    %217 = vmatprep.subr.mxu0 0.0
    %218 = vmatpush2.msra.mxu0 0.0
    %219 = vmatprep.subr.mxu0 0.0
    %220 = vmatpush2.msra.mxu0 0.0
    %221 = vmatprep.subr.mxu0 0.0
    %222 = vmatpush2.msra.mxu0 0.0
    %223 = vmatprep.subr.mxu0 0.0
    %224 = vmatpush2.msra.mxu0 0.0
    %225 = vmatprep.subr.mxu0 0.0
    %226 = vmatpush2.msra.mxu0 0.0
    %227 = vmatprep.subr.mxu0 0.0
    %228 = vmatpush2.msra.mxu0 0.0
    %229 = vmatprep.subr.mxu0 0.0
    %230 = vmatpush2.msra.mxu0 0.0
    %231 = vmatprep.subr.mxu0 0.0
    %232 = vmatpush2.msra.mxu0 0.0
    %233 = vmatprep.subr.mxu0 0.0
    %234 = vmatpush2.msra.mxu0 0.0
    %235 = vmatprep.subr.mxu0 0.0
    %236 = vmatpush2.msra.mxu0 0.0
    %237 = vmatprep.subr.mxu0 0.0
    %238 = vmatpush2.msra.mxu0 0.0
    %239 = vmatprep.subr.mxu0 0.0
    %240 = vmatpush2.msra.mxu0 0.0
    %241 = vmatprep.subr.mxu0 0.0
    %242 = vmatpush2.msra.mxu0 0.0
    %243 = vmatprep.subr.mxu0 0.0
    %244 = vmatpush2.msra.mxu0 0.0
    %245 = vmatprep.subr.mxu0 0.0
    %246 = vmatpush2.msra.mxu0 0.0
    %247 = vmatprep.mubr.f32.mxu0 0.0
    %248 = vmatmul.mubr.f32.gmra.mxu0 %v163
    %v249 = vpop.f32.mrf.mxu0
    %v250 = vadd.f32 0.0, %v249
    %v251 = vpop.f32.mrf.mxu0
    %252 = vmatprep.mubr.f32.mxu0 0.0
    %253 = vmatmul.mubr.f32.gmra.mxu0 %v164
    %v254 = vpop.f32.mrf.mxu0
    %v255 = vadd.f32 0.0, %v254
    %v256 = vpop.f32.mrf.mxu0
    %257 = vdwg.mxu0
    %v258 = vadd.f32 %v165, %v250
    %v259 = vadd.f32 %v166, %v255
    %260 = vst [vmem:[#allocation2] sm:$0xff] %v258
    %261 = vst [vmem:[#allocation2 + $0x8] sm:$0xff] %v259
    // Predicated region
    $region38: #{tpu_custom_call.1} parent=1 // pred_check
      %p262 = pneg %p62
    $region39: #{tpu_custom_call.1} parent=1 // pred_check_branch
      %264 = sbr.rel (%p262) target = $region41
    $region40: #{tpu_custom_call.1} parent=1 // pred_region
      %v265 = vld [vmem:[#allocation2] sm:$0xff]
      %v266 = vld [vmem:[#allocation2 + $0x8] sm:$0xff]
      %v267 = vld [vmem:[%s4] sm:$0x1]
      %v269 = vlaneseq
      %v270 = vshrl.u32 %v269, 7
      %v271 = vsub.s32 0, %v270
      %v272 = vrot.slane %v267, %v271
      %v274 = vadd.f32 %v265, %v272
      %v275 = vadd.f32 %v266, %v272
      %276 = vst [vmem:[#allocation9] sm:$0xff] %v274
      %277 = vst [vmem:[#allocation9 + $0x8] sm:$0xff] %v275
    $region41: #{tpu_custom_call.1} parent=1 // pred_fallthru
      _
    // Predicated region
    $region42: #{tpu_custom_call.1} parent=1 // pred_check
      _
    $region43: #{tpu_custom_call.1} parent=1 // pred_check_branch
      %279 = sbr.rel (0) target = $region45
    $region44: #{tpu_custom_call.1} parent=1 // pred_region
      %s281 = ssub.s32 256, 256
      %282 = vsyncadd [#allocation5], %s281
      %s283 = sshll.u32 [#allocation9], 4
      %s284 = int_to_ptr.vmem [resolvable:$true] %s283
      %289 = dma.vmem_to_hbm [thread:$0]  %s284, 256, %s5, [#allocation5], 128, 128, 8
    $region45: #{tpu_custom_call.1} parent=1 // pred_fallthru
      _
    // Predicated region
    $region46: #{tpu_custom_call.1} parent=1 // pred_check
      _
    $region47: #{tpu_custom_call.1} parent=1 // pred_check_branch
      %291 = sbr.rel (0) target = $region49
    $region48: #{tpu_custom_call.1} parent=1 // pred_region
      %292 = dma.done [#allocation5], 256
    $region49: #{tpu_custom_call.1} parent=1 // pred_fallthru
      _
    %293 = vsyncpa [#allocation4], 1
    %294 = vsyncpa [#allocation7], 1
    %295 = vsyncpa [#allocation5], 1

</llo_original>
